<compile_context>
chip_gen: v5e
topology: v5e:2x2
jax: 0.10.0
libtpu: 0.0.40
codegen_flags: <defaults>
</compile_context>

<pallas_src>
import functools
import math

import jax
import jax.numpy as jnp
from jax.experimental import pallas as pl
from jax.experimental.pallas import tpu as pltpu


# ----------------------------------------------------------------------------
# Pallas kernel: full MagNet forward (all MagNetConv layers + complex ReLU)
# ----------------------------------------------------------------------------
def magnet_kernel(mr_ref, mi_ref, x_ref, w_ref, b_ref, o_ref, acc_ref,
                  *, nlayer, num_terms, fpad, n):
    f = fpad
    mr = mr_ref[...]                       # (N, N)  bf16, real part of rescaled magnetic Laplacian
    mi = mi_ref[...]                       # (N, N)  bf16, imag part
    x = x_ref[...]                         # (N, F)  f32, zero-padded node features

    # lane sign vector: first F lanes -> -1 (rr - ii), last F lanes -> +1 (ri + ir)
    lane = jax.lax.broadcasted_iota(jnp.int32, (1, 2 * f), 1)
    sign = jnp.where(lane < f, -1.0, 1.0).astype(jnp.float32)

    def mm(a, b):
        # bf16 MXU matmul with f32 accumulation
        return jnp.dot(a.astype(jnp.bfloat16), b.astype(jnp.bfloat16),
                       preferred_element_type=jnp.float32)

    def swap_halves(z):                    # [A | B] -> [B | A]  (128-lane aligned slices)
        return jnp.concatenate([z[:, f:], z[:, :f]], axis=1)

    # State slab X = [real | imag]; initially real = imag = x.
    x_slab = jnp.concatenate([x, x], axis=1)               # (N, 2F)

    for l in range(nlayer):
        bias = b_ref[l]                                     # (1, F) f32

        # T0 component slabs:  Tr = [T_rr | T_ri] (LHS mr),  Ti = [T_ii | T_ir] (LHS mi)
        tr = x_slab
        ti = swap_halves(x_slab)

        def project(tr_k, ti_k, widx):
            # D = [T_rr - T_ii | T_ri + T_ir]  (f32, pure VPU)
            d = tr_k + sign * ti_k                          # (N, 2F)
            # Row-stack the two halves -> single (2N, F) @ (F, F) MXU matmul.
            s = jnp.concatenate([d[:, :f], d[:, f:]], axis=0)
            return mm(s, w_ref[widx])                       # (2N, F) f32: [real; imag] contrib

        # term 0
        acc_ref[...] = project(tr, ti, l * num_terms + 0)

        if num_terms > 1:
            tr0, ti0 = tr, ti
            # term 1:  T1 = M @ T0   (fused: shared LHS, two wide matmuls)
            tr1 = mm(mr, tr0)                               # (N, 2F) f32
            ti1 = mm(mi, ti0)
            acc_ref[...] += project(tr1, ti1, l * num_terms + 1)

            # term k>=2:  T_k = 2 * M @ T_{k-1} - T_{k-2}
            for k in range(2, num_terms):
                tr2 = 2.0 * mm(mr, tr1) - tr0
                ti2 = 2.0 * mm(mi, ti1) - ti0
                acc_ref[...] += project(tr2, ti2, l * num_terms + k)
                tr0, ti0 = tr1, ti1
                tr1, ti1 = tr2, ti2

        out = acc_ref[...]                                  # (2N, F): rows [real; imag]
        real = out[:n, :] + bias
        imag = out[n:, :] + bias

        # complex ReLU: mask = (real >= 0), applied to both real and imag
        mask = real >= 0.0
        real = jnp.where(mask, real, 0.0)
        imag = jnp.where(mask, imag, 0.0)

        if l == nlayer - 1:
            # lane-dense (2N, F) output slab, F is a multiple of 128
            o_ref[...] = jnp.concatenate([real, imag], axis=0)
        else:
            x_slab = jnp.concatenate([real, imag], axis=1)  # next layer's [real | imag]


def _round_up(x, m):
    return ((x + m - 1) // m) * m


def magnet_forward_pallas(params, x, m_real, m_imag, *, lane_pad=128):
    """Full MagNet forward (all layers) in a single Pallas TPU kernel."""
    n, fin = x.shape
    nlayer = len(params)
    num_terms = params[0][0].shape[0]
    dims = [fin] + [w.shape[-1] for (w, _) in params]
    fpad = _round_up(max(dims), lane_pad)

    # Zero-pad node features to the common lane-dense width.
    xp = jnp.zeros((n, fpad), jnp.float32).at[:, :fin].set(x.astype(jnp.float32))

    # Stack + zero-pad per-layer weights / biases (padded rows/cols are zero,
    # so padded lanes stay exactly zero through every layer, incl. the ReLU).
    w_stack = jnp.zeros((nlayer * num_terms, fpad, fpad), jnp.float32)
    b_stack = jnp.zeros((nlayer, 1, fpad), jnp.float32)
    for l, (w, b) in enumerate(params):
        din, dout = w.shape[1], w.shape[2]
        w_stack = w_stack.at[l * num_terms:(l + 1) * num_terms, :din, :dout].set(w)
        b_stack = b_stack.at[l, 0, :dout].set(b)
    w_stack = w_stack.astype(jnp.bfloat16)

    # bf16 propagation matrices: halves VMEM footprint + HBM traffic, MXU-native.
    mr = m_real.astype(jnp.bfloat16)
    mi = m_imag.astype(jnp.bfloat16)

    vmem = pl.BlockSpec(memory_space=pltpu.MemorySpace.VMEM)
    kern = functools.partial(magnet_kernel, nlayer=nlayer,
                             num_terms=num_terms, fpad=fpad, n=n)

    out = pl.pallas_call(
        kern,
        out_shape=jax.ShapeDtypeStruct((2 * n, fpad), jnp.float32),
        in_specs=[vmem] * 5,
        out_specs=vmem,
        scratch_shapes=[pltpu.VMEM((2 * n, fpad), jnp.float32)],
    )(mr, mi, xp, w_stack, b_stack)

    fout = params[-1][0].shape[-1]
    real = out[:n, :fout]
    imag = out[n:, :fout]
    return real, imag


# ----------------------------------------------------------------------------
# Glue: dense magnetic-Laplacian normalization (sym), Chebyshev-rescaled
# ----------------------------------------------------------------------------
def magnetic_propagation_matrices(edge_index, edge_weight, num_nodes, q,
                                  lambda_max=2.0):
    src = edge_index[0]
    dst = edge_index[1]
    if edge_weight is None:
        edge_weight = jnp.ones(src.shape[0], dtype=jnp.float32)
    A = jnp.zeros((num_nodes, num_nodes), jnp.float32).at[src, dst].add(edge_weight)
    A = A * (1.0 - jnp.eye(num_nodes, dtype=jnp.float32))        # remove self loops
    A_s = 0.5 * (A + A.T)                                        # symmetrized adjacency
    deg = A_s.sum(axis=1)
    dinv = jnp.where(deg > 0.0, 1.0 / jnp.sqrt(jnp.maximum(deg, 1e-30)), 0.0)
    H = dinv[:, None] * A_s * dinv[None, :]
    theta = 2.0 * jnp.pi * q * (A - A.T)

    eye = jnp.eye(num_nodes, dtype=jnp.float32)
    l_real = eye - H * jnp.cos(theta)          # Re(L),  L = I - H .* exp(i Theta)
    p_imag = H * jnp.sin(theta)                # imag part (target <- source)

    s = 2.0 / lambda_max
    m_real = s * l_real - eye                  # Chebyshev rescale + self-loop fill = -1
    m_imag = s * p_imag                        # imag self-loop fill = 0
    return m_real, m_imag


# ----------------------------------------------------------------------------
# Pure-JAX reference mirroring the kernel math (bf16 MXU matmuls, f32 combine)
# ----------------------------------------------------------------------------
def magnet_forward_ref(params, x, m_real, m_imag, matmul_dtype=jnp.bfloat16):
    def mm(a, b):
        return jnp.dot(a.astype(matmul_dtype), b.astype(matmul_dtype),
                       preferred_element_type=jnp.float32)

    real, imag = x, x
    for (w, b) in params:
        num_terms = w.shape[0]
        # components: rr, ii, ir, ri   (mats: mr, mi, mi, mr)
        t_rr, t_ii, t_ir, t_ri = real, imag, real, imag
        out_real = mm(t_rr - t_ii, w[0])
        out_imag = mm(t_ir + t_ri, w[0])
        if num_terms > 1:
            p_rr, p_ii, p_ir, p_ri = t_rr, t_ii, t_ir, t_ri
            t_rr = mm(m_real, p_rr)
            t_ii = mm(m_imag, p_ii)
            t_ir = mm(m_imag, p_ir)
            t_ri = mm(m_real, p_ri)
            out_real += mm(t_rr - t_ii, w[1])
            out_imag += mm(t_ir + t_ri, w[1])
            for k in range(2, num_terms):
                n_rr = 2.0 * mm(m_real, t_rr) - p_rr
                n_ii = 2.0 * mm(m_imag, t_ii) - p_ii
                n_ir = 2.0 * mm(m_imag, t_ir) - p_ir
                n_ri = 2.0 * mm(m_real, t_ri) - p_ri
                out_real += mm(n_rr - n_ii, w[k])
                out_imag += mm(n_ir + n_ri, w[k])
                p_rr, p_ii, p_ir, p_ri = t_rr, t_ii, t_ir, t_ri
                t_rr, t_ii, t_ir, t_ri = n_rr, n_ii, n_ir, n_ri
        out_real = out_real + b[None, :]
        out_imag = out_imag + b[None, :]
        mask = out_real >= 0.0
        real = jnp.where(mask, out_real, 0.0)
        imag = jnp.where(mask, out_imag, 0.0)
    return real, imag


# ----------------------------------------------------------------------------
# Parameter construction (glorot-uniform, like PyGSD reset_parameters)
# ----------------------------------------------------------------------------
def glorot(key, shape):
    fan_in, fan_out = shape[-2], shape[-1]
    a = math.sqrt(6.0 / (fan_in + fan_out))
    return jax.random.uniform(key, shape, jnp.float32, minval=-a, maxval=a)


def build_magnet_params(key, input_dim, hidden, embed_dim, K, nlayer):
    num_terms = K + 1                                  # PyGSD MagNetConv uses K+1 weights
    if nlayer == 1:
        dims = [(input_dim, embed_dim)]
    else:
        dims = [(input_dim, hidden)]
        dims += [(hidden, hidden)] * (nlayer - 2)
        dims += [(hidden, embed_dim)]
    params = []
    for (din, dout) in dims:
        key, wk = jax.random.split(key)
        w = glorot(wk, (num_terms, din, dout))
        b = jnp.zeros((dout,), jnp.float32)
        params.append((w, b))
    return params


# ----------------------------------------------------------------------------
if __name__ == "__main__":
    # Small, deterministic problem consistent with MagNet's forward:
    #   x: (num_nodes, input_dim), edge_index: (2, num_edges) directed graph.
    num_nodes = 16
    input_dim = 16
    hidden = 32
    embed_dim = 16
    q = 0.25
    K = 2
    nlayer = 2

    key = jax.random.PRNGKey(0)
    key, kx, ke, kp = jax.random.split(key, 4)

    x = jax.random.normal(kx, (num_nodes, input_dim), jnp.float32)

    num_edges = 48
    src = jax.random.randint(ke, (num_edges,), 0, num_nodes)
    dst = jax.random.randint(jax.random.fold_in(ke, 1), (num_edges,), 0, num_nodes)
    edge_index = jnp.stack([src, dst], axis=0)
    edge_weight = None                                  # defaults to ones

    m_real, m_imag = magnetic_propagation_matrices(edge_index, edge_weight,
                                                   num_nodes, q)

    params = build_magnet_params(kp, input_dim, hidden, embed_dim, K, nlayer)

    out_real, out_imag = magnet_forward_pallas(params, x, m_real, m_imag)
    out_real = jax.block_until_ready(out_real)
    out_imag = jax.block_until_ready(out_imag)

    # Sanity check against a pure-JAX reference of the same math / precision.
    ref_real, ref_imag = magnet_forward_ref(params, x, m_real, m_imag)
    assert out_real.shape == (num_nodes, embed_dim)
    assert out_imag.shape == (num_nodes, embed_dim)
    assert jnp.allclose(out_real, ref_real, atol=5e-3, rtol=5e-3)
    assert jnp.allclose(out_imag, ref_imag, atol=5e-3, rtol=5e-3)

    print("KERNEL_OK")
</pallas_src>

<mosaic_0001>
module attributes {stable_mosaic.version = 11 : i64} {
  func.func @magnet_kernel(%arg0: memref<16x16xbf16, #tpu.memory_space<vmem>>, %arg1: memref<16x16xbf16, #tpu.memory_space<vmem>>, %arg2: memref<16x128xf32, #tpu.memory_space<vmem>>, %arg3: memref<6x128x128xbf16, #tpu.memory_space<vmem>>, %arg4: memref<2x1x128xf32, #tpu.memory_space<vmem>>, %arg5: memref<32x128xf32, #tpu.memory_space<vmem>>, %arg6: memref<32x128xf32, #tpu.memory_space<vmem>>) attributes {dimension_semantics = [], scalar_prefetch = 0 : i64, scratch_operands = 1 : i64, tpu.core_type = #tpu.core_type<tc>} {
    %c0 = arith.constant 0 : index
    %c0_0 = arith.constant 0 : index
    %0 = vector.load %arg0[%c0, %c0_0] : memref<16x16xbf16, #tpu.memory_space<vmem>>, vector<16x16xbf16>
    %c0_1 = arith.constant 0 : index
    %c0_2 = arith.constant 0 : index
    %1 = vector.load %arg1[%c0_1, %c0_2] : memref<16x16xbf16, #tpu.memory_space<vmem>>, vector<16x16xbf16>
    %c0_3 = arith.constant 0 : index
    %c0_4 = arith.constant 0 : index
    %2 = vector.load %arg2[%c0_3, %c0_4] : memref<16x128xf32, #tpu.memory_space<vmem>>, vector<16x128xf32>
    %3 = tpu.iota {dimensions = array<i32: 1>} : vector<1x256xi32>
    %c128_i32 = arith.constant 128 : i32
    %4 = vector.broadcast %c128_i32 : i32 to vector<1x256xi32>
    %5 = arith.cmpi slt, %3, %4 : vector<1x256xi32>
    %cst = arith.constant -1.000000e+00 : f32
    %cst_5 = arith.constant 1.000000e+00 : f32
    %6 = vector.broadcast %cst : f32 to vector<1x256xf32>
    %7 = vector.broadcast %cst_5 : f32 to vector<1x256xf32>
    %8 = arith.select %5, %6, %7 : vector<1x256xi1>, vector<1x256xf32>
    %9 = tpu.concatenate %2, %2 in 1 : vector<16x128xf32>, vector<16x128xf32> -> vector<16x256xf32>
    %c0_6 = arith.constant 0 : index
    %c0_7 = arith.constant 0 : index
    %c0_8 = arith.constant 0 : index
    %10 = vector.load %arg4[%c0_6, %c0_7, %c0_8] : memref<2x1x128xf32, #tpu.memory_space<vmem>>, vector<1x1x128xf32>
    %11 = vector.shape_cast %10 : vector<1x1x128xf32> to vector<1x128xf32>
    %12 = vector.extract_strided_slice %9 {offsets = [0, 128], sizes = [16, 128], strides = [1, 1]} : vector<16x256xf32> to vector<16x128xf32>
    %13 = vector.extract_strided_slice %9 {offsets = [0, 0], sizes = [16, 128], strides = [1, 1]} : vector<16x256xf32> to vector<16x128xf32>
    %14 = tpu.concatenate %12, %13 in 1 : vector<16x128xf32>, vector<16x128xf32> -> vector<16x256xf32>
    %15 = vector.broadcast %8 : vector<1x256xf32> to vector<16x256xf32>
    %16 = arith.mulf %15, %14 : vector<16x256xf32>
    %17 = arith.addf %9, %16 : vector<16x256xf32>
    %18 = vector.extract_strided_slice %17 {offsets = [0, 0], sizes = [16, 128], strides = [1, 1]} : vector<16x256xf32> to vector<16x128xf32>
    %19 = vector.extract_strided_slice %17 {offsets = [0, 128], sizes = [16, 128], strides = [1, 1]} : vector<16x256xf32> to vector<16x128xf32>
    %20 = tpu.concatenate %18, %19 in 0 : vector<16x128xf32>, vector<16x128xf32> -> vector<32x128xf32>
    %c0_9 = arith.constant 0 : index
    %c0_10 = arith.constant 0 : index
    %c0_11 = arith.constant 0 : index
    %21 = vector.load %arg3[%c0_9, %c0_10, %c0_11] : memref<6x128x128xbf16, #tpu.memory_space<vmem>>, vector<1x128x128xbf16>
    %22 = vector.shape_cast %21 : vector<1x128x128xbf16> to vector<128x128xbf16>
    %23 = arith.truncf %20 : vector<32x128xf32> to vector<32x128xbf16>
    %cst_12 = arith.constant dense<0.000000e+00> : vector<32x128xf32>
    %24 = tpu.matmul %23, %22, %cst_12 {dimension_numbers = #tpu.dot_dimension_numbers<[1], [0], [0], [1], [0, 0, 1, 1], [], []>} : vector<32x128xbf16>, vector<128x128xbf16>, vector<32x128xf32> -> vector<32x128xf32>
    %c0_13 = arith.constant 0 : index
    %c0_14 = arith.constant 0 : index
    %25 = vector.load %arg6[%c0_13, %c0_14] : memref<32x128xf32, #tpu.memory_space<vmem>>, vector<32x128xf32>
    tpu.vector_store %arg6[%c0_13, %c0_14], %24 {strides = array<i32>} : memref<32x128xf32, #tpu.memory_space<vmem>>, vector<32x128xf32>,
    %26 = arith.truncf %9 : vector<16x256xf32> to vector<16x256xbf16>
    %cst_15 = arith.constant dense<0.000000e+00> : vector<16x256xf32>
    %27 = tpu.matmul %0, %26, %cst_15 {dimension_numbers = #tpu.dot_dimension_numbers<[1], [0], [0], [1], [0, 0, 1, 1], [], []>} : vector<16x16xbf16>, vector<16x256xbf16>, vector<16x256xf32> -> vector<16x256xf32>
    %28 = arith.truncf %14 : vector<16x256xf32> to vector<16x256xbf16>
    %cst_16 = arith.constant dense<0.000000e+00> : vector<16x256xf32>
    %29 = tpu.matmul %1, %28, %cst_16 {dimension_numbers = #tpu.dot_dimension_numbers<[1], [0], [0], [1], [0, 0, 1, 1], [], []>} : vector<16x16xbf16>, vector<16x256xbf16>, vector<16x256xf32> -> vector<16x256xf32>
    %c0_17 = arith.constant 0 : index
    %c0_18 = arith.constant 0 : index
    %30 = vector.load %arg6[%c0_17, %c0_18] : memref<32x128xf32, #tpu.memory_space<vmem>>, vector<32x128xf32>
    %31 = vector.broadcast %8 : vector<1x256xf32> to vector<16x256xf32>
    %32 = arith.mulf %31, %29 : vector<16x256xf32>
    %33 = arith.addf %27, %32 : vector<16x256xf32>
    %34 = vector.extract_strided_slice %33 {offsets = [0, 0], sizes = [16, 128], strides = [1, 1]} : vector<16x256xf32> to vector<16x128xf32>
    %35 = vector.extract_strided_slice %33 {offsets = [0, 128], sizes = [16, 128], strides = [1, 1]} : vector<16x256xf32> to vector<16x128xf32>
    %36 = tpu.concatenate %34, %35 in 0 : vector<16x128xf32>, vector<16x128xf32> -> vector<32x128xf32>
    %c1 = arith.constant 1 : index
    %c0_19 = arith.constant 0 : index
    %c0_20 = arith.constant 0 : index
    %37 = vector.load %arg3[%c1, %c0_19, %c0_20] : memref<6x128x128xbf16, #tpu.memory_space<vmem>>, vector<1x128x128xbf16>
    %38 = vector.shape_cast %37 : vector<1x128x128xbf16> to vector<128x128xbf16>
    %39 = arith.truncf %36 : vector<32x128xf32> to vector<32x128xbf16>
    %cst_21 = arith.constant dense<0.000000e+00> : vector<32x128xf32>
    %40 = tpu.matmul %39, %38, %cst_21 {dimension_numbers = #tpu.dot_dimension_numbers<[1], [0], [0], [1], [0, 0, 1, 1], [], []>} : vector<32x128xbf16>, vector<128x128xbf16>, vector<32x128xf32> -> vector<32x128xf32>
    %41 = arith.addf %30, %40 : vector<32x128xf32>
    %c0_22 = arith.constant 0 : index
    %c0_23 = arith.constant 0 : index
    %42 = vector.load %arg6[%c0_22, %c0_23] : memref<32x128xf32, #tpu.memory_space<vmem>>, vector<32x128xf32>
    tpu.vector_store %arg6[%c0_22, %c0_23], %41 {strides = array<i32>} : memref<32x128xf32, #tpu.memory_space<vmem>>, vector<32x128xf32>,
    %43 = arith.truncf %27 : vector<16x256xf32> to vector<16x256xbf16>
    %cst_24 = arith.constant dense<0.000000e+00> : vector<16x256xf32>
    %44 = tpu.matmul %0, %43, %cst_24 {dimension_numbers = #tpu.dot_dimension_numbers<[1], [0], [0], [1], [0, 0, 1, 1], [], []>} : vector<16x16xbf16>, vector<16x256xbf16>, vector<16x256xf32> -> vector<16x256xf32>
    %cst_25 = arith.constant 2.000000e+00 : f32
    %45 = vector.broadcast %cst_25 : f32 to vector<16x256xf32>
    %46 = arith.mulf %45, %44 : vector<16x256xf32>
    %47 = arith.subf %46, %9 : vector<16x256xf32>
    %48 = arith.truncf %29 : vector<16x256xf32> to vector<16x256xbf16>
    %cst_26 = arith.constant dense<0.000000e+00> : vector<16x256xf32>
    %49 = tpu.matmul %1, %48, %cst_26 {dimension_numbers = #tpu.dot_dimension_numbers<[1], [0], [0], [1], [0, 0, 1, 1], [], []>} : vector<16x16xbf16>, vector<16x256xbf16>, vector<16x256xf32> -> vector<16x256xf32>
    %cst_27 = arith.constant 2.000000e+00 : f32
    %50 = vector.broadcast %cst_27 : f32 to vector<16x256xf32>
    %51 = arith.mulf %50, %49 : vector<16x256xf32>
    %52 = arith.subf %51, %14 : vector<16x256xf32>
    %c0_28 = arith.constant 0 : index
    %c0_29 = arith.constant 0 : index
    %53 = vector.load %arg6[%c0_28, %c0_29] : memref<32x128xf32, #tpu.memory_space<vmem>>, vector<32x128xf32>
    %54 = vector.broadcast %8 : vector<1x256xf32> to vector<16x256xf32>
    %55 = arith.mulf %54, %52 : vector<16x256xf32>
    %56 = arith.addf %47, %55 : vector<16x256xf32>
    %57 = vector.extract_strided_slice %56 {offsets = [0, 0], sizes = [16, 128], strides = [1, 1]} : vector<16x256xf32> to vector<16x128xf32>
    %58 = vector.extract_strided_slice %56 {offsets = [0, 128], sizes = [16, 128], strides = [1, 1]} : vector<16x256xf32> to vector<16x128xf32>
    %59 = tpu.concatenate %57, %58 in 0 : vector<16x128xf32>, vector<16x128xf32> -> vector<32x128xf32>
    %c2 = arith.constant 2 : index
    %c0_30 = arith.constant 0 : index
    %c0_31 = arith.constant 0 : index
    %60 = vector.load %arg3[%c2, %c0_30, %c0_31] : memref<6x128x128xbf16, #tpu.memory_space<vmem>>, vector<1x128x128xbf16>
    %61 = vector.shape_cast %60 : vector<1x128x128xbf16> to vector<128x128xbf16>
    %62 = arith.truncf %59 : vector<32x128xf32> to vector<32x128xbf16>
    %cst_32 = arith.constant dense<0.000000e+00> : vector<32x128xf32>
    %63 = tpu.matmul %62, %61, %cst_32 {dimension_numbers = #tpu.dot_dimension_numbers<[1], [0], [0], [1], [0, 0, 1, 1], [], []>} : vector<32x128xbf16>, vector<128x128xbf16>, vector<32x128xf32> -> vector<32x128xf32>
    %64 = arith.addf %53, %63 : vector<32x128xf32>
    %c0_33 = arith.constant 0 : index
    %c0_34 = arith.constant 0 : index
    %65 = vector.load %arg6[%c0_33, %c0_34] : memref<32x128xf32, #tpu.memory_space<vmem>>, vector<32x128xf32>
    tpu.vector_store %arg6[%c0_33, %c0_34], %64 {strides = array<i32>} : memref<32x128xf32, #tpu.memory_space<vmem>>, vector<32x128xf32>,
    %c0_35 = arith.constant 0 : index
    %c0_36 = arith.constant 0 : index
    %66 = vector.load %arg6[%c0_35, %c0_36] : memref<32x128xf32, #tpu.memory_space<vmem>>, vector<32x128xf32>
    %67 = vector.extract_strided_slice %66 {offsets = [0, 0], sizes = [16, 128], strides = [1, 1]} : vector<32x128xf32> to vector<16x128xf32>
    %68 = vector.broadcast %11 : vector<1x128xf32> to vector<16x128xf32>
    %69 = arith.addf %67, %68 : vector<16x128xf32>
    %70 = vector.extract_strided_slice %66 {offsets = [16, 0], sizes = [16, 128], strides = [1, 1]} : vector<32x128xf32> to vector<16x128xf32>
    %71 = vector.broadcast %11 : vector<1x128xf32> to vector<16x128xf32>
    %72 = arith.addf %70, %71 : vector<16x128xf32>
    %cst_37 = arith.constant 0.000000e+00 : f32
    %73 = vector.broadcast %cst_37 : f32 to vector<16x128xf32>
    %74 = arith.cmpf oge, %69, %73 : vector<16x128xf32>
    %cst_38 = arith.constant 0.000000e+00 : f32
    %75 = vector.broadcast %cst_38 : f32 to vector<16x128xf32>
    %76 = arith.select %74, %69, %75 : vector<16x128xi1>, vector<16x128xf32>
    %cst_39 = arith.constant 0.000000e+00 : f32
    %77 = vector.broadcast %cst_39 : f32 to vector<16x128xf32>
    %78 = arith.select %74, %72, %77 : vector<16x128xi1>, vector<16x128xf32>
    %79 = tpu.concatenate %76, %78 in 1 : vector<16x128xf32>, vector<16x128xf32> -> vector<16x256xf32>
    %c1_40 = arith.constant 1 : index
    %c0_41 = arith.constant 0 : index
    %c0_42 = arith.constant 0 : index
    %80 = vector.load %arg4[%c1_40, %c0_41, %c0_42] : memref<2x1x128xf32, #tpu.memory_space<vmem>>, vector<1x1x128xf32>
    %81 = vector.shape_cast %80 : vector<1x1x128xf32> to vector<1x128xf32>
    %82 = vector.extract_strided_slice %79 {offsets = [0, 128], sizes = [16, 128], strides = [1, 1]} : vector<16x256xf32> to vector<16x128xf32>
    %83 = vector.extract_strided_slice %79 {offsets = [0, 0], sizes = [16, 128], strides = [1, 1]} : vector<16x256xf32> to vector<16x128xf32>
    %84 = tpu.concatenate %82, %83 in 1 : vector<16x128xf32>, vector<16x128xf32> -> vector<16x256xf32>
    %85 = vector.broadcast %8 : vector<1x256xf32> to vector<16x256xf32>
    %86 = arith.mulf %85, %84 : vector<16x256xf32>
    %87 = arith.addf %79, %86 : vector<16x256xf32>
    %88 = vector.extract_strided_slice %87 {offsets = [0, 0], sizes = [16, 128], strides = [1, 1]} : vector<16x256xf32> to vector<16x128xf32>
    %89 = vector.extract_strided_slice %87 {offsets = [0, 128], sizes = [16, 128], strides = [1, 1]} : vector<16x256xf32> to vector<16x128xf32>
    %90 = tpu.concatenate %88, %89 in 0 : vector<16x128xf32>, vector<16x128xf32> -> vector<32x128xf32>
    %c3 = arith.constant 3 : index
    %c0_43 = arith.constant 0 : index
    %c0_44 = arith.constant 0 : index
    %91 = vector.load %arg3[%c3, %c0_43, %c0_44] : memref<6x128x128xbf16, #tpu.memory_space<vmem>>, vector<1x128x128xbf16>
    %92 = vector.shape_cast %91 : vector<1x128x128xbf16> to vector<128x128xbf16>
    %93 = arith.truncf %90 : vector<32x128xf32> to vector<32x128xbf16>
    %cst_45 = arith.constant dense<0.000000e+00> : vector<32x128xf32>
    %94 = tpu.matmul %93, %92, %cst_45 {dimension_numbers = #tpu.dot_dimension_numbers<[1], [0], [0], [1], [0, 0, 1, 1], [], []>} : vector<32x128xbf16>, vector<128x128xbf16>, vector<32x128xf32> -> vector<32x128xf32>
    %c0_46 = arith.constant 0 : index
    %c0_47 = arith.constant 0 : index
    %95 = vector.load %arg6[%c0_46, %c0_47] : memref<32x128xf32, #tpu.memory_space<vmem>>, vector<32x128xf32>
    tpu.vector_store %arg6[%c0_46, %c0_47], %94 {strides = array<i32>} : memref<32x128xf32, #tpu.memory_space<vmem>>, vector<32x128xf32>,
    %96 = arith.truncf %79 : vector<16x256xf32> to vector<16x256xbf16>
    %cst_48 = arith.constant dense<0.000000e+00> : vector<16x256xf32>
    %97 = tpu.matmul %0, %96, %cst_48 {dimension_numbers = #tpu.dot_dimension_numbers<[1], [0], [0], [1], [0, 0, 1, 1], [], []>} : vector<16x16xbf16>, vector<16x256xbf16>, vector<16x256xf32> -> vector<16x256xf32>
    %98 = arith.truncf %84 : vector<16x256xf32> to vector<16x256xbf16>
    %cst_49 = arith.constant dense<0.000000e+00> : vector<16x256xf32>
    %99 = tpu.matmul %1, %98, %cst_49 {dimension_numbers = #tpu.dot_dimension_numbers<[1], [0], [0], [1], [0, 0, 1, 1], [], []>} : vector<16x16xbf16>, vector<16x256xbf16>, vector<16x256xf32> -> vector<16x256xf32>
    %c0_50 = arith.constant 0 : index
    %c0_51 = arith.constant 0 : index
    %100 = vector.load %arg6[%c0_50, %c0_51] : memref<32x128xf32, #tpu.memory_space<vmem>>, vector<32x128xf32>
    %101 = vector.broadcast %8 : vector<1x256xf32> to vector<16x256xf32>
    %102 = arith.mulf %101, %99 : vector<16x256xf32>
    %103 = arith.addf %97, %102 : vector<16x256xf32>
    %104 = vector.extract_strided_slice %103 {offsets = [0, 0], sizes = [16, 128], strides = [1, 1]} : vector<16x256xf32> to vector<16x128xf32>
    %105 = vector.extract_strided_slice %103 {offsets = [0, 128], sizes = [16, 128], strides = [1, 1]} : vector<16x256xf32> to vector<16x128xf32>
    %106 = tpu.concatenate %104, %105 in 0 : vector<16x128xf32>, vector<16x128xf32> -> vector<32x128xf32>
    %c4 = arith.constant 4 : index
    %c0_52 = arith.constant 0 : index
    %c0_53 = arith.constant 0 : index
    %107 = vector.load %arg3[%c4, %c0_52, %c0_53] : memref<6x128x128xbf16, #tpu.memory_space<vmem>>, vector<1x128x128xbf16>
    %108 = vector.shape_cast %107 : vector<1x128x128xbf16> to vector<128x128xbf16>
    %109 = arith.truncf %106 : vector<32x128xf32> to vector<32x128xbf16>
    %cst_54 = arith.constant dense<0.000000e+00> : vector<32x128xf32>
    %110 = tpu.matmul %109, %108, %cst_54 {dimension_numbers = #tpu.dot_dimension_numbers<[1], [0], [0], [1], [0, 0, 1, 1], [], []>} : vector<32x128xbf16>, vector<128x128xbf16>, vector<32x128xf32> -> vector<32x128xf32>
    %111 = arith.addf %100, %110 : vector<32x128xf32>
    %c0_55 = arith.constant 0 : index
    %c0_56 = arith.constant 0 : index
    %112 = vector.load %arg6[%c0_55, %c0_56] : memref<32x128xf32, #tpu.memory_space<vmem>>, vector<32x128xf32>
    tpu.vector_store %arg6[%c0_55, %c0_56], %111 {strides = array<i32>} : memref<32x128xf32, #tpu.memory_space<vmem>>, vector<32x128xf32>,
    %113 = arith.truncf %97 : vector<16x256xf32> to vector<16x256xbf16>
    %cst_57 = arith.constant dense<0.000000e+00> : vector<16x256xf32>
    %114 = tpu.matmul %0, %113, %cst_57 {dimension_numbers = #tpu.dot_dimension_numbers<[1], [0], [0], [1], [0, 0, 1, 1], [], []>} : vector<16x16xbf16>, vector<16x256xbf16>, vector<16x256xf32> -> vector<16x256xf32>
    %cst_58 = arith.constant 2.000000e+00 : f32
    %115 = vector.broadcast %cst_58 : f32 to vector<16x256xf32>
    %116 = arith.mulf %115, %114 : vector<16x256xf32>
    %117 = arith.subf %116, %79 : vector<16x256xf32>
    %118 = arith.truncf %99 : vector<16x256xf32> to vector<16x256xbf16>
    %cst_59 = arith.constant dense<0.000000e+00> : vector<16x256xf32>
    %119 = tpu.matmul %1, %118, %cst_59 {dimension_numbers = #tpu.dot_dimension_numbers<[1], [0], [0], [1], [0, 0, 1, 1], [], []>} : vector<16x16xbf16>, vector<16x256xbf16>, vector<16x256xf32> -> vector<16x256xf32>
    %cst_60 = arith.constant 2.000000e+00 : f32
    %120 = vector.broadcast %cst_60 : f32 to vector<16x256xf32>
    %121 = arith.mulf %120, %119 : vector<16x256xf32>
    %122 = arith.subf %121, %84 : vector<16x256xf32>
    %c0_61 = arith.constant 0 : index
    %c0_62 = arith.constant 0 : index
    %123 = vector.load %arg6[%c0_61, %c0_62] : memref<32x128xf32, #tpu.memory_space<vmem>>, vector<32x128xf32>
    %124 = vector.broadcast %8 : vector<1x256xf32> to vector<16x256xf32>
    %125 = arith.mulf %124, %122 : vector<16x256xf32>
    %126 = arith.addf %117, %125 : vector<16x256xf32>
    %127 = vector.extract_strided_slice %126 {offsets = [0, 0], sizes = [16, 128], strides = [1, 1]} : vector<16x256xf32> to vector<16x128xf32>
    %128 = vector.extract_strided_slice %126 {offsets = [0, 128], sizes = [16, 128], strides = [1, 1]} : vector<16x256xf32> to vector<16x128xf32>
    %129 = tpu.concatenate %127, %128 in 0 : vector<16x128xf32>, vector<16x128xf32> -> vector<32x128xf32>
    %c5 = arith.constant 5 : index
    %c0_63 = arith.constant 0 : index
    %c0_64 = arith.constant 0 : index
    %130 = vector.load %arg3[%c5, %c0_63, %c0_64] : memref<6x128x128xbf16, #tpu.memory_space<vmem>>, vector<1x128x128xbf16>
    %131 = vector.shape_cast %130 : vector<1x128x128xbf16> to vector<128x128xbf16>
    %132 = arith.truncf %129 : vector<32x128xf32> to vector<32x128xbf16>
    %cst_65 = arith.constant dense<0.000000e+00> : vector<32x128xf32>
    %133 = tpu.matmul %132, %131, %cst_65 {dimension_numbers = #tpu.dot_dimension_numbers<[1], [0], [0], [1], [0, 0, 1, 1], [], []>} : vector<32x128xbf16>, vector<128x128xbf16>, vector<32x128xf32> -> vector<32x128xf32>
    %134 = arith.addf %123, %133 : vector<32x128xf32>
    %c0_66 = arith.constant 0 : index
    %c0_67 = arith.constant 0 : index
    %135 = vector.load %arg6[%c0_66, %c0_67] : memref<32x128xf32, #tpu.memory_space<vmem>>, vector<32x128xf32>
    tpu.vector_store %arg6[%c0_66, %c0_67], %134 {strides = array<i32>} : memref<32x128xf32, #tpu.memory_space<vmem>>, vector<32x128xf32>,
    %c0_68 = arith.constant 0 : index
    %c0_69 = arith.constant 0 : index
    %136 = vector.load %arg6[%c0_68, %c0_69] : memref<32x128xf32, #tpu.memory_space<vmem>>, vector<32x128xf32>
    %137 = vector.extract_strided_slice %136 {offsets = [0, 0], sizes = [16, 128], strides = [1, 1]} : vector<32x128xf32> to vector<16x128xf32>
    %138 = vector.broadcast %81 : vector<1x128xf32> to vector<16x128xf32>
    %139 = arith.addf %137, %138 : vector<16x128xf32>
    %140 = vector.extract_strided_slice %136 {offsets = [16, 0], sizes = [16, 128], strides = [1, 1]} : vector<32x128xf32> to vector<16x128xf32>
    %141 = vector.broadcast %81 : vector<1x128xf32> to vector<16x128xf32>
    %142 = arith.addf %140, %141 : vector<16x128xf32>
    %cst_70 = arith.constant 0.000000e+00 : f32
    %143 = vector.broadcast %cst_70 : f32 to vector<16x128xf32>
    %144 = arith.cmpf oge, %139, %143 : vector<16x128xf32>
    %cst_71 = arith.constant 0.000000e+00 : f32
    %145 = vector.broadcast %cst_71 : f32 to vector<16x128xf32>
    %146 = arith.select %144, %139, %145 : vector<16x128xi1>, vector<16x128xf32>
    %cst_72 = arith.constant 0.000000e+00 : f32
    %147 = vector.broadcast %cst_72 : f32 to vector<16x128xf32>
    %148 = arith.select %144, %142, %147 : vector<16x128xi1>, vector<16x128xf32>
    %149 = tpu.concatenate %146, %148 in 0 : vector<16x128xf32>, vector<16x128xf32> -> vector<32x128xf32>
    %c0_73 = arith.constant 0 : index
    %c0_74 = arith.constant 0 : index
    %150 = vector.load %arg5[%c0_73, %c0_74] : memref<32x128xf32, #tpu.memory_space<vmem>>, vector<32x128xf32>
    tpu.vector_store %arg5[%c0_73, %c0_74], %149 {strides = array<i32>} : memref<32x128xf32, #tpu.memory_space<vmem>>, vector<32x128xf32>,
    return
  }
}

</mosaic_0001>

<llo_original>
// kernel: tpu_custom_call.1
$region0: #{tpu_custom_call.1}
  #allocation0 [shape = 'u32[]', space=smem, size = 0x4, offset = 0x4, fixed_abs, tag = 'smem constant byte address 0x4 - core index']
  #allocation1 [shape = 'u32[72,128]{1,0:T(1,128)}', space=vmem, size = 0x9000, scoped, tag = 'internal scratch']
  #allocation2 [shape = 'f32[32,128]{1,0:T(8,128)}', space=vmem, size = 0x4000, scoped, tag = 'scratch operand']
  %s0 = inlined_call_operand.hbm [shape: bf16[16,16], index: 0, kind: input, shape index: {}]
  %s1 = inlined_call_operand.hbm [shape: bf16[16,16], index: 1, kind: input, shape index: {}]
  %s2 = inlined_call_operand.hbm [shape: f32[16,128], index: 2, kind: input, shape index: {}]
  %s3 = inlined_call_operand.hbm [shape: bf16[6,128,128], index: 3, kind: input, shape index: {}]
  %s4 = inlined_call_operand.vmem [shape: f32[2,1,128], index: 4, kind: input, shape index: {}]
  %s5 = inlined_call_operand.hbm [shape: f32[32,128], index: 5, kind: output, shape index: {}]
  %s6 = sld [smem:[#allocation0]]
  $region46: #{tpu_custom_call.1} parent=0
    _
  %s8 = ssub.s32 1, %s6
  %s9 = scalar_select 0, %s8, %s6
  $region1: #{tpu_custom_call.1} parent=0
    #allocation3 [shape = 'u8[4096]{0}', space=vmem, size = 0x1000, scoped, tag = 'input window, operand 0, single buffered']
    #allocation4 [shape = 's32[1]{0}', space=sflag, size = 0x4, scoped, tag = 'scoped memory for tpu_custom_call.1']
    #allocation5 [shape = 's32[1]{0}', space=sflag, size = 0x4, scoped, tag = 'scoped memory for tpu_custom_call.1']
    #allocation6 [shape = 'u8[4096]{0}', space=vmem, size = 0x1000, scoped, tag = 'input window, operand 1, single buffered']
    #allocation7 [shape = 's32[1]{0}', space=sflag, size = 0x4, scoped, tag = 'scoped memory for tpu_custom_call.1']
    #allocation8 [shape = 'u8[8192]{0}', space=vmem, size = 0x2000, scoped, tag = 'input window, operand 2, single buffered']
    #allocation9 [shape = 'u8[196608]{0}', space=vmem, size = 0x30000, scoped, tag = 'input window, operand 3, single buffered']
    #allocation10 [shape = 's32[1]{0}', space=sflag, size = 0x4, scoped, tag = 'scoped memory for tpu_custom_call.1']
    #allocation11 [shape = 'u8[16384]{0}', space=vmem, size = 0x4000, scoped, tag = 'output window, operand 0, single buffered']
    %10 = vsyncpa [#allocation4], 0
    %11 = vsyncpa [#allocation7], 0
    %12 = vsyncpa [#allocation10], 0
    %13 = vsyncpa [#allocation5], 0
    // Predicated region
    $region2: #{tpu_custom_call.1} parent=1 // pred_check
      _
    $region3: #{tpu_custom_call.1} parent=1 // pred_check_branch
      %15 = sbr.rel (0) target = $region5
    $region4: #{tpu_custom_call.1} parent=1 // pred_region
      %17 = vsyncadd [#allocation4], 0
      %s18 = sshll.u32 %s0, 4
      %s19 = int_to_ptr.hbm [resolvable:$true] %s18
      %s20 = sshll.u32 [#allocation3], 4
      %s21 = int_to_ptr.vmem [resolvable:$true] %s20
      %26 = dma.hbm_to_vmem [thread:$0]  %s19, 128, %s21, [#allocation4], 64, 64, 4
    $region5: #{tpu_custom_call.1} parent=1 // pred_fallthru
      _
    // Predicated region
    $region6: #{tpu_custom_call.1} parent=1 // pred_check
      _
    $region7: #{tpu_custom_call.1} parent=1 // pred_check_branch
      %28 = sbr.rel (0) target = $region9
    $region8: #{tpu_custom_call.1} parent=1 // pred_region
      %30 = vsyncadd [#allocation7], 0
      %s31 = sshll.u32 %s1, 4
      %s32 = int_to_ptr.hbm [resolvable:$true] %s31
      %s33 = sshll.u32 [#allocation6], 4
      %s34 = int_to_ptr.vmem [resolvable:$true] %s33
      %39 = dma.hbm_to_vmem [thread:$0]  %s32, 128, %s34, [#allocation7], 64, 64, 4
    $region9: #{tpu_custom_call.1} parent=1 // pred_fallthru
      _
    // Predicated region
    $region10: #{tpu_custom_call.1} parent=1 // pred_check
      _
    $region11: #{tpu_custom_call.1} parent=1 // pred_check_branch
      %41 = sbr.rel (0) target = $region13
    $region12: #{tpu_custom_call.1} parent=1 // pred_region
      %43 = vsyncadd [#allocation7], 0
      %s44 = sshll.u32 %s2, 4
      %s45 = int_to_ptr.hbm [resolvable:$true] %s44
      %s46 = sshll.u32 [#allocation8], 4
      %s47 = int_to_ptr.vmem [resolvable:$true] %s46
      %52 = dma.hbm_to_vmem [thread:$0]  %s45, 256, %s47, [#allocation7], 128, 128, 8
    $region13: #{tpu_custom_call.1} parent=1 // pred_fallthru
      _
    // Predicated region
    $region14: #{tpu_custom_call.1} parent=1 // pred_check
      _
    $region15: #{tpu_custom_call.1} parent=1 // pred_check_branch
      %54 = sbr.rel (0) target = $region17
    $region16: #{tpu_custom_call.1} parent=1 // pred_region
      %56 = vsyncadd [#allocation10], 0
      %s57 = sshll.u32 %s3, 4
      %s58 = int_to_ptr.hbm [resolvable:$true] %s57
      %s59 = sshll.u32 [#allocation9], 4
      %s60 = int_to_ptr.vmem [resolvable:$true] %s59
      %65 = dma.hbm_to_vmem [thread:$0]  %s58, 6144, %s60, [#allocation10], 64, 64, 4
    $region17: #{tpu_custom_call.1} parent=1 // pred_fallthru
      _
    // Predicated region
    $region18: #{tpu_custom_call.1} parent=1 // pred_check
      _
    $region19: #{tpu_custom_call.1} parent=1 // pred_check_branch
      %67 = sbr.rel (0) target = $region21
    $region20: #{tpu_custom_call.1} parent=1 // pred_region
      _
    $region21: #{tpu_custom_call.1} parent=1 // pred_fallthru
      _
    // Predicated region
    $region22: #{tpu_custom_call.1} parent=1 // pred_check
      _
    $region23: #{tpu_custom_call.1} parent=1 // pred_check_branch
      %69 = sbr.rel (0) target = $region25
    $region24: #{tpu_custom_call.1} parent=1 // pred_region
      %71 = dma.done [#allocation4], 128
    $region25: #{tpu_custom_call.1} parent=1 // pred_fallthru
      _
    // Predicated region
    $region26: #{tpu_custom_call.1} parent=1 // pred_check
      _
    $region27: #{tpu_custom_call.1} parent=1 // pred_check_branch
      %73 = sbr.rel (0) target = $region29
    $region28: #{tpu_custom_call.1} parent=1 // pred_region
      %75 = dma.done [#allocation7], 128
    $region29: #{tpu_custom_call.1} parent=1 // pred_fallthru
      _
    // Predicated region
    $region30: #{tpu_custom_call.1} parent=1 // pred_check
      _
    $region31: #{tpu_custom_call.1} parent=1 // pred_check_branch
      %77 = sbr.rel (0) target = $region33
    $region32: #{tpu_custom_call.1} parent=1 // pred_region
      %79 = dma.done [#allocation7], 256
    $region33: #{tpu_custom_call.1} parent=1 // pred_fallthru
      _
    // Predicated region
    $region34: #{tpu_custom_call.1} parent=1 // pred_check
      _
    $region35: #{tpu_custom_call.1} parent=1 // pred_check_branch
      %81 = sbr.rel (0) target = $region37
    $region36: #{tpu_custom_call.1} parent=1 // pred_region
      %83 = dma.done [#allocation10], 6144
    $region37: #{tpu_custom_call.1} parent=1 // pred_fallthru
      _
    %v85 = vld [vmem:[#allocation3] sm:$0xf]
    %v86 = vld [vmem:[#allocation3 + $0x4] sm:$0xf]
    %v87 = vld [vmem:[#allocation6] sm:$0xf]
    %v88 = vld [vmem:[#allocation6 + $0x4] sm:$0xf]
    %v89 = vld [vmem:[#allocation8] sm:$0xff]
    %v90 = vld [vmem:[#allocation8 + $0x8] sm:$0xff]
    %v91 = vlaneseq
    %v92 = vand.u32 %v91, 127
    %v93 = vadd.s32 %v92, 128
    %vm94 = vcmp.lt.s32.totalorder %v92, 128
    %vm95 = vcmp.lt.s32.totalorder %v93, 128
    %v96 = vsel %vm94, -1.0, 1.0
    %v97 = vsel %vm95, -1.0, 1.0
    %v98 = vld [vmem:[%s4] sm:$0x1]
    %v99 = vmul.f32 %v96, %v89
    %v100 = vmul.f32 %v97, %v89
    %v101 = vmul.f32 %v96, %v90
    %v102 = vmul.f32 %v97, %v90
    %v103 = vadd.f32 %v89, %v99
    %v104 = vadd.f32 %v89, %v100
    %v105 = vadd.f32 %v90, %v101
    %v106 = vadd.f32 %v90, %v102
    %v107 = vld [vmem:[#allocation9] sm:$0xf]
    %v108 = vld [vmem:[#allocation9 + $0x4] sm:$0xf]
    %v109 = vld [vmem:[#allocation9 + $0x8] sm:$0xf]
    %v110 = vld [vmem:[#allocation9 + $0xc] sm:$0xf]
    %v111 = vld [vmem:[#allocation9 + $0x10] sm:$0xf]
    %v112 = vld [vmem:[#allocation9 + $0x14] sm:$0xf]
    %v113 = vld [vmem:[#allocation9 + $0x18] sm:$0xf]
    %v114 = vld [vmem:[#allocation9 + $0x1c] sm:$0xf]
    %v115 = vld [vmem:[#allocation9 + $0x20] sm:$0xf]
    %v116 = vld [vmem:[#allocation9 + $0x24] sm:$0xf]
    %v117 = vld [vmem:[#allocation9 + $0x28] sm:$0xf]
    %v118 = vld [vmem:[#allocation9 + $0x2c] sm:$0xf]
    %v119 = vld [vmem:[#allocation9 + $0x30] sm:$0xf]
    %v120 = vld [vmem:[#allocation9 + $0x34] sm:$0xf]
    %v121 = vld [vmem:[#allocation9 + $0x38] sm:$0xf]
    %v122 = vld [vmem:[#allocation9 + $0x3c] sm:$0xf]
    %v123 = vpack.c.bf16 %v105, %v103
    %v124 = vpack.c.bf16 %v106, %v104
    %v141 = vunpack.c.l.b16 %v107
    %v142 = vunpack.c.l.b16 %v108
    %v143 = vunpack.c.l.b16 %v109
    %v144 = vunpack.c.l.b16 %v110
    %v145 = vunpack.c.l.b16 %v111
    %v146 = vunpack.c.l.b16 %v112
    %v147 = vunpack.c.l.b16 %v113
    %v148 = vunpack.c.l.b16 %v114
    %v149 = vunpack.c.l.b16 %v115
    %v150 = vunpack.c.l.b16 %v116
    %v151 = vunpack.c.l.b16 %v117
    %v152 = vunpack.c.l.b16 %v118
    %v153 = vunpack.c.l.b16 %v119
    %v154 = vunpack.c.l.b16 %v120
    %v155 = vunpack.c.l.b16 %v121
    %v156 = vunpack.c.l.b16 %v122
    %v157 = vpack.c.b16 %v142, %v141
    %v158 = vpack.c.b16 %v144, %v143
    %v159 = vpack.c.b16 %v146, %v145
    %v160 = vpack.c.b16 %v148, %v147
    %v161 = vpack.c.b16 %v150, %v149
    %v162 = vpack.c.b16 %v152, %v151
    %v163 = vpack.c.b16 %v154, %v153
    %v164 = vpack.c.b16 %v156, %v155
    %173 = vmatpush.bf16.msra.mxu0 %v164
    %174 = vmatpush.bf16.msra.mxu0 %v163
    %175 = vmatpush.bf16.msra.mxu0 %v162
    %176 = vmatpush.bf16.msra.mxu0 %v161
    %177 = vmatpush.bf16.msra.mxu0 %v160
    %178 = vmatpush.bf16.msra.mxu0 %v159
    %179 = vmatpush.bf16.msra.mxu0 %v158
    %180 = vmatpush.bf16.msra.mxu0 %v157
    %181 = vmatmul.bf16.gmra.mxu0 %v123
    %v182 = vpop.f32.mrf.mxu0
    %v183 = vadd.f32 0.0, %v182
    %v184 = vpop.f32.mrf.mxu0
    %v185 = vadd.f32 0.0, %v184
    %186 = vmatmul.bf16.gmra.mxu0 %v124
    %v187 = vpop.f32.mrf.mxu0
    %v188 = vadd.f32 0.0, %v187
    %v189 = vpop.f32.mrf.mxu0
    %v190 = vadd.f32 0.0, %v189
    %191 = vdwg.mxu0
    %192 = vst [vmem:[#allocation2] sm:$0xff] %v183
    %193 = vst [vmem:[#allocation2 + $0x8] sm:$0xff] %v185
    %194 = vst [vmem:[#allocation2 + $0x10] sm:$0xff] %v188
    %195 = vst [vmem:[#allocation2 + $0x18] sm:$0xff] %v190
    %v196 = vpack.c.bf16 %v90, %v89
    %v199 = vunpack.c.l.b16 %v85
    %v200 = vunpack.c.l.b16 %v86
    %v201 = vpack.c.b16 %v200, %v199
    %vm202 = vcmask 130048
    %v204 = vsel %vm202, %v201, 0
    %206 = vmatpush.bf16.msra.mxu0 0
    %207 = vmatpush.bf16.msra.mxu0 0
    %208 = vmatpush.bf16.msra.mxu0 0
    %209 = vmatpush.bf16.msra.mxu0 0
    %210 = vmatpush.bf16.msra.mxu0 0
    %211 = vmatpush.bf16.msra.mxu0 0
    %212 = vmatpush.bf16.msra.mxu0 0
    %213 = vmatpush.bf16.msra.mxu0 %v196
    %214 = vmatmul.bf16.gmra.mxu0 %v204
    %v215 = vpop.f32.mrf.mxu0
    %v216 = vadd.f32 0.0, %v215
    %v217 = vpop.f32.mrf.mxu0
    %v218 = vadd.f32 0.0, %v217
    %219 = vdwg.mxu0
    %v222 = vunpack.c.l.b16 %v87
    %v223 = vunpack.c.l.b16 %v88
    %v224 = vpack.c.b16 %v223, %v222
    %v226 = vsel %vm202, %v224, 0
    %228 = vmatpush.bf16.msra.mxu0 0
    %229 = vmatpush.bf16.msra.mxu0 0
    %230 = vmatpush.bf16.msra.mxu0 0
    %231 = vmatpush.bf16.msra.mxu0 0
    %232 = vmatpush.bf16.msra.mxu0 0
    %233 = vmatpush.bf16.msra.mxu0 0
    %234 = vmatpush.bf16.msra.mxu0 0
    %235 = vmatpush.bf16.msra.mxu0 %v196
    %236 = vmatmul.bf16.gmra.mxu0 %v226
    %v237 = vpop.f32.mrf.mxu0
    %v238 = vadd.f32 0.0, %v237
    %v239 = vpop.f32.mrf.mxu0
    %v240 = vadd.f32 0.0, %v239
    %241 = vdwg.mxu0
    %v242 = vld [vmem:[#allocation2] sm:$0xff]
    %v243 = vld [vmem:[#allocation2 + $0x8] sm:$0xff]
    %v244 = vld [vmem:[#allocation2 + $0x10] sm:$0xff]
    %v245 = vld [vmem:[#allocation2 + $0x18] sm:$0xff]
    %v246 = vmul.f32 %v96, %v238
    %v247 = vmul.f32 %v97, %v238
    %v248 = vmul.f32 %v96, %v240
    %v249 = vmul.f32 %v97, %v240
    %v250 = vadd.f32 %v216, %v246
    %v251 = vadd.f32 %v216, %v247
    %v252 = vadd.f32 %v218, %v248
    %v253 = vadd.f32 %v218, %v249
    %s254 = scalar_lea.vmem [#allocation9], 64
    %v255 = vld [vmem:[%s254] sm:$0xf]
    %v256 = vld [vmem:[%s254 + $0x4] sm:$0xf]
    %v257 = vld [vmem:[%s254 + $0x8] sm:$0xf]
    %v258 = vld [vmem:[%s254 + $0xc] sm:$0xf]
    %v259 = vld [vmem:[%s254 + $0x10] sm:$0xf]
    %v260 = vld [vmem:[%s254 + $0x14] sm:$0xf]
    %v261 = vld [vmem:[%s254 + $0x18] sm:$0xf]
    %v262 = vld [vmem:[%s254 + $0x1c] sm:$0xf]
    %v263 = vld [vmem:[%s254 + $0x20] sm:$0xf]
    %v264 = vld [vmem:[%s254 + $0x24] sm:$0xf]
    %v265 = vld [vmem:[%s254 + $0x28] sm:$0xf]
    %v266 = vld [vmem:[%s254 + $0x2c] sm:$0xf]
    %v267 = vld [vmem:[%s254 + $0x30] sm:$0xf]
    %v268 = vld [vmem:[%s254 + $0x34] sm:$0xf]
    %v269 = vld [vmem:[%s254 + $0x38] sm:$0xf]
    %v270 = vld [vmem:[%s254 + $0x3c] sm:$0xf]
    %v271 = vpack.c.bf16 %v252, %v250
    %v272 = vpack.c.bf16 %v253, %v251
    %v289 = vunpack.c.l.b16 %v255
    %v290 = vunpack.c.l.b16 %v256
    %v291 = vunpack.c.l.b16 %v257
    %v292 = vunpack.c.l.b16 %v258
    %v293 = vunpack.c.l.b16 %v259
    %v294 = vunpack.c.l.b16 %v260
    %v295 = vunpack.c.l.b16 %v261
    %v296 = vunpack.c.l.b16 %v262
    %v297 = vunpack.c.l.b16 %v263
    %v298 = vunpack.c.l.b16 %v264
    %v299 = vunpack.c.l.b16 %v265
    %v300 = vunpack.c.l.b16 %v266
    %v301 = vunpack.c.l.b16 %v267
    %v302 = vunpack.c.l.b16 %v268
    %v303 = vunpack.c.l.b16 %v269
    %v304 = vunpack.c.l.b16 %v270
    %v305 = vpack.c.b16 %v290, %v289
    %v306 = vpack.c.b16 %v292, %v291
    %v307 = vpack.c.b16 %v294, %v293
    %v308 = vpack.c.b16 %v296, %v295
    %v309 = vpack.c.b16 %v298, %v297
    %v310 = vpack.c.b16 %v300, %v299
    %v311 = vpack.c.b16 %v302, %v301
    %v312 = vpack.c.b16 %v304, %v303
    %321 = vmatpush.bf16.msra.mxu0 %v312
    %322 = vmatpush.bf16.msra.mxu0 %v311
    %323 = vmatpush.bf16.msra.mxu0 %v310
    %324 = vmatpush.bf16.msra.mxu0 %v309
    %325 = vmatpush.bf16.msra.mxu0 %v308
    %326 = vmatpush.bf16.msra.mxu0 %v307
    %327 = vmatpush.bf16.msra.mxu0 %v306
    %328 = vmatpush.bf16.msra.mxu0 %v305
    %329 = vmatmul.bf16.gmra.mxu0 %v271
    %v330 = vpop.f32.mrf.mxu0
    %v331 = vadd.f32 0.0, %v330
    %v332 = vpop.f32.mrf.mxu0
    %v333 = vadd.f32 0.0, %v332
    %334 = vmatmul.bf16.gmra.mxu0 %v272
    %v335 = vpop.f32.mrf.mxu0
    %v336 = vadd.f32 0.0, %v335
    %v337 = vpop.f32.mrf.mxu0
    %v338 = vadd.f32 0.0, %v337
    %339 = vdwg.mxu0
    %v340 = vadd.f32 %v242, %v331
    %v341 = vadd.f32 %v243, %v333
    %v342 = vadd.f32 %v244, %v336
    %v343 = vadd.f32 %v245, %v338
    %344 = vst [vmem:[#allocation2] sm:$0xff] %v340
    %345 = vst [vmem:[#allocation2 + $0x8] sm:$0xff] %v341
    %346 = vst [vmem:[#allocation2 + $0x10] sm:$0xff] %v342
    %347 = vst [vmem:[#allocation2 + $0x18] sm:$0xff] %v343
    %v348 = vpack.c.bf16 %v218, %v216
    %349 = vmatpush.bf16.msra.mxu0 0
    %350 = vmatpush.bf16.msra.mxu0 0
    %351 = vmatpush.bf16.msra.mxu0 0
    %352 = vmatpush.bf16.msra.mxu0 0
    %353 = vmatpush.bf16.msra.mxu0 0
    %354 = vmatpush.bf16.msra.mxu0 0
    %355 = vmatpush.bf16.msra.mxu0 0
    %356 = vmatpush.bf16.msra.mxu0 %v348
    %357 = vmatmul.bf16.gmra.mxu0 %v204
    %v358 = vpop.f32.mrf.mxu0
    %v359 = vadd.f32 0.0, %v358
    %v360 = vpop.f32.mrf.mxu0
    %v361 = vadd.f32 0.0, %v360
    %362 = vdwg.mxu0
    %v363 = vmul.f32 %v359, 2.0
    %v364 = vmul.f32 %v361, 2.0
    %v365 = vsub.f32 %v363, %v89
    %v366 = vsub.f32 %v364, %v90
    %v367 = vpack.c.bf16 %v240, %v238
    %368 = vmatpush.bf16.msra.mxu0 0
    %369 = vmatpush.bf16.msra.mxu0 0
    %370 = vmatpush.bf16.msra.mxu0 0
    %371 = vmatpush.bf16.msra.mxu0 0
    %372 = vmatpush.bf16.msra.mxu0 0
    %373 = vmatpush.bf16.msra.mxu0 0
    %374 = vmatpush.bf16.msra.mxu0 0
    %375 = vmatpush.bf16.msra.mxu0 %v367
    %376 = vmatmul.bf16.gmra.mxu0 %v226
    %v377 = vpop.f32.mrf.mxu0
    %v378 = vadd.f32 0.0, %v377
    %v379 = vpop.f32.mrf.mxu0
    %v380 = vadd.f32 0.0, %v379
    %381 = vdwg.mxu0
    %v382 = vmul.f32 %v378, 2.0
    %v383 = vmul.f32 %v380, 2.0
    %v384 = vsub.f32 %v382, %v89
    %v385 = vsub.f32 %v383, %v90
    %v386 = vld [vmem:[#allocation2] sm:$0xff]
    %v387 = vld [vmem:[#allocation2 + $0x8] sm:$0xff]
    %v388 = vld [vmem:[#allocation2 + $0x10] sm:$0xff]
    %v389 = vld [vmem:[#allocation2 + $0x18] sm:$0xff]
    %v390 = vmul.f32 %v96, %v384
    %v391 = vmul.f32 %v97, %v384
    %v392 = vmul.f32 %v96, %v385
    %v393 = vmul.f32 %v97, %v385
    %v394 = vadd.f32 %v365, %v390
    %v395 = vadd.f32 %v365, %v391
    %v396 = vadd.f32 %v366, %v392
    %v397 = vadd.f32 %v366, %v393
    %s398 = scalar_lea.vmem [#allocation9], 128
    %v399 = vld [vmem:[%s398] sm:$0xf]
    %v400 = vld [vmem:[%s398 + $0x4] sm:$0xf]
    %v401 = vld [vmem:[%s398 + $0x8] sm:$0xf]
    %v402 = vld [vmem:[%s398 + $0xc] sm:$0xf]
    %v403 = vld [vmem:[%s398 + $0x10] sm:$0xf]
    %v404 = vld [vmem:[%s398 + $0x14] sm:$0xf]
    %v405 = vld [vmem:[%s398 + $0x18] sm:$0xf]
    %v406 = vld [vmem:[%s398 + $0x1c] sm:$0xf]
    %v407 = vld [vmem:[%s398 + $0x20] sm:$0xf]
    %v408 = vld [vmem:[%s398 + $0x24] sm:$0xf]
    %v409 = vld [vmem:[%s398 + $0x28] sm:$0xf]
    %v410 = vld [vmem:[%s398 + $0x2c] sm:$0xf]
    %v411 = vld [vmem:[%s398 + $0x30] sm:$0xf]
    %v412 = vld [vmem:[%s398 + $0x34] sm:$0xf]
    %v413 = vld [vmem:[%s398 + $0x38] sm:$0xf]
    %v414 = vld [vmem:[%s398 + $0x3c] sm:$0xf]
    %v415 = vpack.c.bf16 %v396, %v394
    %v416 = vpack.c.bf16 %v397, %v395
    %v433 = vunpack.c.l.b16 %v399
    %v434 = vunpack.c.l.b16 %v400
    %v435 = vunpack.c.l.b16 %v401
    %v436 = vunpack.c.l.b16 %v402
    %v437 = vunpack.c.l.b16 %v403
    %v438 = vunpack.c.l.b16 %v404
    %v439 = vunpack.c.l.b16 %v405
    %v440 = vunpack.c.l.b16 %v406
    %v441 = vunpack.c.l.b16 %v407
    %v442 = vunpack.c.l.b16 %v408
    %v443 = vunpack.c.l.b16 %v409
    %v444 = vunpack.c.l.b16 %v410
    %v445 = vunpack.c.l.b16 %v411
    %v446 = vunpack.c.l.b16 %v412
    %v447 = vunpack.c.l.b16 %v413
    %v448 = vunpack.c.l.b16 %v414
    %v449 = vpack.c.b16 %v434, %v433
    %v450 = vpack.c.b16 %v436, %v435
    %v451 = vpack.c.b16 %v438, %v437
    %v452 = vpack.c.b16 %v440, %v439
    %v453 = vpack.c.b16 %v442, %v441
    %v454 = vpack.c.b16 %v444, %v443
    %v455 = vpack.c.b16 %v446, %v445
    %v456 = vpack.c.b16 %v448, %v447
    %465 = vmatpush.bf16.msra.mxu0 %v456
    %466 = vmatpush.bf16.msra.mxu0 %v455
    %467 = vmatpush.bf16.msra.mxu0 %v454
    %468 = vmatpush.bf16.msra.mxu0 %v453
    %469 = vmatpush.bf16.msra.mxu0 %v452
    %470 = vmatpush.bf16.msra.mxu0 %v451
    %471 = vmatpush.bf16.msra.mxu0 %v450
    %472 = vmatpush.bf16.msra.mxu0 %v449
    %473 = vmatmul.bf16.gmra.mxu0 %v415
    %v474 = vpop.f32.mrf.mxu0
    %v475 = vadd.f32 0.0, %v474
    %v476 = vpop.f32.mrf.mxu0
    %v477 = vadd.f32 0.0, %v476
    %478 = vmatmul.bf16.gmra.mxu0 %v416
    %v479 = vpop.f32.mrf.mxu0
    %v480 = vadd.f32 0.0, %v479
    %v481 = vpop.f32.mrf.mxu0
    %v482 = vadd.f32 0.0, %v481
    %483 = vdwg.mxu0
    %v484 = vadd.f32 %v386, %v475
    %v485 = vadd.f32 %v387, %v477
    %v486 = vadd.f32 %v388, %v480
    %v487 = vadd.f32 %v389, %v482
    %488 = vst [vmem:[#allocation2] sm:$0xff] %v484
    %489 = vst [vmem:[#allocation2 + $0x8] sm:$0xff] %v485
    %490 = vst [vmem:[#allocation2 + $0x10] sm:$0xff] %v486
    %491 = vst [vmem:[#allocation2 + $0x18] sm:$0xff] %v487
    %v492 = vld [vmem:[#allocation2] sm:$0xff]
    %v493 = vld [vmem:[#allocation2 + $0x8] sm:$0xff]
    %v494 = vld [vmem:[#allocation2 + $0x10] sm:$0xff]
    %v495 = vld [vmem:[#allocation2 + $0x18] sm:$0xff]
    %v497 = vperm.slane %v98, 0
    %v499 = vadd.f32 %v492, %v497
    %v500 = vadd.f32 %v493, %v497
    %v501 = vadd.f32 %v494, %v497
    %v502 = vadd.f32 %v495, %v497
    %vm503 = vcmp.ge.f32.partialorder %v499, 0.0
    %vm504 = vcmp.ge.f32.partialorder %v500, 0.0
    %v505 = vsel %vm503, %v499, 0.0
    %v506 = vsel %vm504, %v500, 0.0
    %v507 = vsel %vm503, %v501, 0.0
    %v508 = vsel %vm504, %v502, 0.0
    %s509 = scalar_lea.vmem %s4, 1
    %v510 = vld [vmem:[%s509] sm:$0x1]
    %v511 = vmul.f32 %v96, %v507
    %v512 = vmul.f32 %v97, %v505
    %v513 = vmul.f32 %v96, %v508
    %v514 = vmul.f32 %v97, %v506
    %v515 = vadd.f32 %v505, %v511
    %v516 = vadd.f32 %v507, %v512
    %v517 = vadd.f32 %v506, %v513
    %v518 = vadd.f32 %v508, %v514
    %s519 = scalar_lea.vmem [#allocation9], 192
    %v520 = vld [vmem:[%s519] sm:$0xf]
    %v521 = vld [vmem:[%s519 + $0x4] sm:$0xf]
    %v522 = vld [vmem:[%s519 + $0x8] sm:$0xf]
    %v523 = vld [vmem:[%s519 + $0xc] sm:$0xf]
    %v524 = vld [vmem:[%s519 + $0x10] sm:$0xf]
    %v525 = vld [vmem:[%s519 + $0x14] sm:$0xf]
    %v526 = vld [vmem:[%s519 + $0x18] sm:$0xf]
    %v527 = vld [vmem:[%s519 + $0x1c] sm:$0xf]
    %v528 = vld [vmem:[%s519 + $0x20] sm:$0xf]
    %v529 = vld [vmem:[%s519 + $0x24] sm:$0xf]
    %v530 = vld [vmem:[%s519 + $0x28] sm:$0xf]
    %v531 = vld [vmem:[%s519 + $0x2c] sm:$0xf]
    %v532 = vld [vmem:[%s519 + $0x30] sm:$0xf]
    %v533 = vld [vmem:[%s519 + $0x34] sm:$0xf]
    %v534 = vld [vmem:[%s519 + $0x38] sm:$0xf]
    %v535 = vld [vmem:[%s519 + $0x3c] sm:$0xf]
    %v536 = vpack.c.bf16 %v517, %v515
    %v537 = vpack.c.bf16 %v518, %v516
    %v554 = vunpack.c.l.b16 %v520
    %v555 = vunpack.c.l.b16 %v521
    %v556 = vunpack.c.l.b16 %v522
    %v557 = vunpack.c.l.b16 %v523
    %v558 = vunpack.c.l.b16 %v524
    %v559 = vunpack.c.l.b16 %v525
    %v560 = vunpack.c.l.b16 %v526
    %v561 = vunpack.c.l.b16 %v527
    %v562 = vunpack.c.l.b16 %v528
    %v563 = vunpack.c.l.b16 %v529
    %v564 = vunpack.c.l.b16 %v530
    %v565 = vunpack.c.l.b16 %v531
    %v566 = vunpack.c.l.b16 %v532
    %v567 = vunpack.c.l.b16 %v533
    %v568 = vunpack.c.l.b16 %v534
    %v569 = vunpack.c.l.b16 %v535
    %v570 = vpack.c.b16 %v555, %v554
    %v571 = vpack.c.b16 %v557, %v556
    %v572 = vpack.c.b16 %v559, %v558
    %v573 = vpack.c.b16 %v561, %v560
    %v574 = vpack.c.b16 %v563, %v562
    %v575 = vpack.c.b16 %v565, %v564
    %v576 = vpack.c.b16 %v567, %v566
    %v577 = vpack.c.b16 %v569, %v568
    %586 = vmatpush.bf16.msra.mxu0 %v577
    %587 = vmatpush.bf16.msra.mxu0 %v576
    %588 = vmatpush.bf16.msra.mxu0 %v575
    %589 = vmatpush.bf16.msra.mxu0 %v574
    %590 = vmatpush.bf16.msra.mxu0 %v573
    %591 = vmatpush.bf16.msra.mxu0 %v572
    %592 = vmatpush.bf16.msra.mxu0 %v571
    %593 = vmatpush.bf16.msra.mxu0 %v570
    %594 = vmatmul.bf16.gmra.mxu0 %v536
    %v595 = vpop.f32.mrf.mxu0
    %v596 = vadd.f32 0.0, %v595
    %v597 = vpop.f32.mrf.mxu0
    %v598 = vadd.f32 0.0, %v597
    %599 = vmatmul.bf16.gmra.mxu0 %v537
    %v600 = vpop.f32.mrf.mxu0
    %v601 = vadd.f32 0.0, %v600
    %v602 = vpop.f32.mrf.mxu0
    %v603 = vadd.f32 0.0, %v602
    %604 = vdwg.mxu0
    %605 = vst [vmem:[#allocation2] sm:$0xff] %v596
    %606 = vst [vmem:[#allocation2 + $0x8] sm:$0xff] %v598
    %607 = vst [vmem:[#allocation2 + $0x10] sm:$0xff] %v601
    %608 = vst [vmem:[#allocation2 + $0x18] sm:$0xff] %v603
    %v609 = vpack.c.bf16 %v506, %v505
    %v610 = vpack.c.bf16 %v508, %v507
    %611 = vmatpush.bf16.msra.mxu0 0
    %612 = vmatpush.bf16.msra.mxu0 0
    %613 = vmatpush.bf16.msra.mxu0 0
    %614 = vmatpush.bf16.msra.mxu0 0
    %615 = vmatpush.bf16.msra.mxu0 0
    %616 = vmatpush.bf16.msra.mxu0 0
    %617 = vmatpush.bf16.msra.mxu0 0
    %618 = vmatpush.bf16.msra.mxu0 %v609
    %619 = vmatmul.bf16.gmra.mxu0 %v204
    %v620 = vpop.f32.mrf.mxu0
    %v621 = vadd.f32 0.0, %v620
    %v622 = vpop.f32.mrf.mxu0
    %v623 = vadd.f32 0.0, %v622
    %624 = vdwg.mxu0
    %625 = vmatpush.bf16.msra.mxu0 0
    %626 = vmatpush.bf16.msra.mxu0 0
    %627 = vmatpush.bf16.msra.mxu0 0
    %628 = vmatpush.bf16.msra.mxu0 0
    %629 = vmatpush.bf16.msra.mxu0 0
    %630 = vmatpush.bf16.msra.mxu0 0
    %631 = vmatpush.bf16.msra.mxu0 0
    %632 = vmatpush.bf16.msra.mxu0 %v610
    %633 = vmatmul.bf16.gmra.mxu0 %v204
    %v634 = vpop.f32.mrf.mxu0
    %v635 = vadd.f32 0.0, %v634
    %v636 = vpop.f32.mrf.mxu0
    %v637 = vadd.f32 0.0, %v636
    %638 = vdwg.mxu0
    %639 = vmatpush.bf16.msra.mxu0 0
    %640 = vmatpush.bf16.msra.mxu0 0
    %641 = vmatpush.bf16.msra.mxu0 0
    %642 = vmatpush.bf16.msra.mxu0 0
    %643 = vmatpush.bf16.msra.mxu0 0
    %644 = vmatpush.bf16.msra.mxu0 0
    %645 = vmatpush.bf16.msra.mxu0 0
    %646 = vmatpush.bf16.msra.mxu0 %v610
    %647 = vmatmul.bf16.gmra.mxu0 %v226
    %v648 = vpop.f32.mrf.mxu0
    %v649 = vadd.f32 0.0, %v648
    %v650 = vpop.f32.mrf.mxu0
    %v651 = vadd.f32 0.0, %v650
    %652 = vdwg.mxu0
    %653 = vmatpush.bf16.msra.mxu0 0
    %654 = vmatpush.bf16.msra.mxu0 0
    %655 = vmatpush.bf16.msra.mxu0 0
    %656 = vmatpush.bf16.msra.mxu0 0
    %657 = vmatpush.bf16.msra.mxu0 0
    %658 = vmatpush.bf16.msra.mxu0 0
    %659 = vmatpush.bf16.msra.mxu0 0
    %660 = vmatpush.bf16.msra.mxu0 %v609
    %661 = vmatmul.bf16.gmra.mxu0 %v226
    %v662 = vpop.f32.mrf.mxu0
    %v663 = vadd.f32 0.0, %v662
    %v664 = vpop.f32.mrf.mxu0
    %v665 = vadd.f32 0.0, %v664
    %666 = vdwg.mxu0
    %v667 = vld [vmem:[#allocation2] sm:$0xff]
    %v668 = vld [vmem:[#allocation2 + $0x8] sm:$0xff]
    %v669 = vld [vmem:[#allocation2 + $0x10] sm:$0xff]
    %v670 = vld [vmem:[#allocation2 + $0x18] sm:$0xff]
    %v671 = vmul.f32 %v96, %v649
    %v672 = vmul.f32 %v97, %v663
    %v673 = vmul.f32 %v96, %v651
    %v674 = vmul.f32 %v97, %v665
    %v675 = vadd.f32 %v621, %v671
    %v676 = vadd.f32 %v635, %v672
    %v677 = vadd.f32 %v623, %v673
    %v678 = vadd.f32 %v637, %v674
    %s679 = scalar_lea.vmem [#allocation9], 256
    %v680 = vld [vmem:[%s679] sm:$0xf]
    %v681 = vld [vmem:[%s679 + $0x4] sm:$0xf]
    %v682 = vld [vmem:[%s679 + $0x8] sm:$0xf]
    %v683 = vld [vmem:[%s679 + $0xc] sm:$0xf]
    %v684 = vld [vmem:[%s679 + $0x10] sm:$0xf]
    %v685 = vld [vmem:[%s679 + $0x14] sm:$0xf]
    %v686 = vld [vmem:[%s679 + $0x18] sm:$0xf]
    %v687 = vld [vmem:[%s679 + $0x1c] sm:$0xf]
    %v688 = vld [vmem:[%s679 + $0x20] sm:$0xf]
    %v689 = vld [vmem:[%s679 + $0x24] sm:$0xf]
    %v690 = vld [vmem:[%s679 + $0x28] sm:$0xf]
    %v691 = vld [vmem:[%s679 + $0x2c] sm:$0xf]
    %v692 = vld [vmem:[%s679 + $0x30] sm:$0xf]
    %v693 = vld [vmem:[%s679 + $0x34] sm:$0xf]
    %v694 = vld [vmem:[%s679 + $0x38] sm:$0xf]
    %v695 = vld [vmem:[%s679 + $0x3c] sm:$0xf]
    %v696 = vpack.c.bf16 %v677, %v675
    %v697 = vpack.c.bf16 %v678, %v676
    %v714 = vunpack.c.l.b16 %v680
    %v715 = vunpack.c.l.b16 %v681
    %v716 = vunpack.c.l.b16 %v682
    %v717 = vunpack.c.l.b16 %v683
    %v718 = vunpack.c.l.b16 %v684
    %v719 = vunpack.c.l.b16 %v685
    %v720 = vunpack.c.l.b16 %v686
    %v721 = vunpack.c.l.b16 %v687
    %v722 = vunpack.c.l.b16 %v688
    %v723 = vunpack.c.l.b16 %v689
    %v724 = vunpack.c.l.b16 %v690
    %v725 = vunpack.c.l.b16 %v691
    %v726 = vunpack.c.l.b16 %v692
    %v727 = vunpack.c.l.b16 %v693
    %v728 = vunpack.c.l.b16 %v694
    %v729 = vunpack.c.l.b16 %v695
    %v730 = vpack.c.b16 %v715, %v714
    %v731 = vpack.c.b16 %v717, %v716
    %v732 = vpack.c.b16 %v719, %v718
    %v733 = vpack.c.b16 %v721, %v720
    %v734 = vpack.c.b16 %v723, %v722
    %v735 = vpack.c.b16 %v725, %v724
    %v736 = vpack.c.b16 %v727, %v726
    %v737 = vpack.c.b16 %v729, %v728
    %746 = vmatpush.bf16.msra.mxu0 %v737
    %747 = vmatpush.bf16.msra.mxu0 %v736
    %748 = vmatpush.bf16.msra.mxu0 %v735
    %749 = vmatpush.bf16.msra.mxu0 %v734
    %750 = vmatpush.bf16.msra.mxu0 %v733
    %751 = vmatpush.bf16.msra.mxu0 %v732
    %752 = vmatpush.bf16.msra.mxu0 %v731
    %753 = vmatpush.bf16.msra.mxu0 %v730
    %754 = vmatmul.bf16.gmra.mxu0 %v696
    %v755 = vpop.f32.mrf.mxu0
    %v756 = vadd.f32 0.0, %v755
    %v757 = vpop.f32.mrf.mxu0
    %v758 = vadd.f32 0.0, %v757
    %759 = vmatmul.bf16.gmra.mxu0 %v697
    %v760 = vpop.f32.mrf.mxu0
    %v761 = vadd.f32 0.0, %v760
    %v762 = vpop.f32.mrf.mxu0
    %v763 = vadd.f32 0.0, %v762
    %764 = vdwg.mxu0
    %v765 = vadd.f32 %v667, %v756
    %v766 = vadd.f32 %v668, %v758
    %v767 = vadd.f32 %v669, %v761
    %v768 = vadd.f32 %v670, %v763
    %769 = vst [vmem:[#allocation2] sm:$0xff] %v765
    %770 = vst [vmem:[#allocation2 + $0x8] sm:$0xff] %v766
    %771 = vst [vmem:[#allocation2 + $0x10] sm:$0xff] %v767
    %772 = vst [vmem:[#allocation2 + $0x18] sm:$0xff] %v768
    %v773 = vpack.c.bf16 %v623, %v621
    %v774 = vpack.c.bf16 %v637, %v635
    %775 = vmatpush.bf16.msra.mxu0 0
    %776 = vmatpush.bf16.msra.mxu0 0
    %777 = vmatpush.bf16.msra.mxu0 0
    %778 = vmatpush.bf16.msra.mxu0 0
    %779 = vmatpush.bf16.msra.mxu0 0
    %780 = vmatpush.bf16.msra.mxu0 0
    %781 = vmatpush.bf16.msra.mxu0 0
    %782 = vmatpush.bf16.msra.mxu0 %v773
    %783 = vmatmul.bf16.gmra.mxu0 %v204
    %v784 = vpop.f32.mrf.mxu0
    %v785 = vadd.f32 0.0, %v784
    %v786 = vpop.f32.mrf.mxu0
    %v787 = vadd.f32 0.0, %v786
    %788 = vdwg.mxu0
    %789 = vmatpush.bf16.msra.mxu0 0
    %790 = vmatpush.bf16.msra.mxu0 0
    %791 = vmatpush.bf16.msra.mxu0 0
    %792 = vmatpush.bf16.msra.mxu0 0
    %793 = vmatpush.bf16.msra.mxu0 0
    %794 = vmatpush.bf16.msra.mxu0 0
    %795 = vmatpush.bf16.msra.mxu0 0
    %796 = vmatpush.bf16.msra.mxu0 %v774
    %797 = vmatmul.bf16.gmra.mxu0 %v204
    %v798 = vpop.f32.mrf.mxu0
    %v799 = vadd.f32 0.0, %v798
    %v800 = vpop.f32.mrf.mxu0
    %v801 = vadd.f32 0.0, %v800
    %802 = vdwg.mxu0
    %v803 = vmul.f32 %v785, 2.0
    %v804 = vmul.f32 %v799, 2.0
    %v805 = vmul.f32 %v787, 2.0
    %v806 = vmul.f32 %v801, 2.0
    %v807 = vsub.f32 %v803, %v505
    %v808 = vsub.f32 %v804, %v507
    %v809 = vsub.f32 %v805, %v506
    %v810 = vsub.f32 %v806, %v508
    %v811 = vpack.c.bf16 %v651, %v649
    %v812 = vpack.c.bf16 %v665, %v663
    %813 = vmatpush.bf16.msra.mxu0 0
    %814 = vmatpush.bf16.msra.mxu0 0
    %815 = vmatpush.bf16.msra.mxu0 0
    %816 = vmatpush.bf16.msra.mxu0 0
    %817 = vmatpush.bf16.msra.mxu0 0
    %818 = vmatpush.bf16.msra.mxu0 0
    %819 = vmatpush.bf16.msra.mxu0 0
    %820 = vmatpush.bf16.msra.mxu0 %v811
    %821 = vmatmul.bf16.gmra.mxu0 %v226
    %v822 = vpop.f32.mrf.mxu0
    %v823 = vadd.f32 0.0, %v822
    %v824 = vpop.f32.mrf.mxu0
    %v825 = vadd.f32 0.0, %v824
    %826 = vdwg.mxu0
    %827 = vmatpush.bf16.msra.mxu0 0
    %828 = vmatpush.bf16.msra.mxu0 0
    %829 = vmatpush.bf16.msra.mxu0 0
    %830 = vmatpush.bf16.msra.mxu0 0
    %831 = vmatpush.bf16.msra.mxu0 0
    %832 = vmatpush.bf16.msra.mxu0 0
    %833 = vmatpush.bf16.msra.mxu0 0
    %834 = vmatpush.bf16.msra.mxu0 %v812
    %835 = vmatmul.bf16.gmra.mxu0 %v226
    %v836 = vpop.f32.mrf.mxu0
    %v837 = vadd.f32 0.0, %v836
    %v838 = vpop.f32.mrf.mxu0
    %v839 = vadd.f32 0.0, %v838
    %840 = vdwg.mxu0
    %v841 = vmul.f32 %v823, 2.0
    %v842 = vmul.f32 %v837, 2.0
    %v843 = vmul.f32 %v825, 2.0
    %v844 = vmul.f32 %v839, 2.0
    %v845 = vsub.f32 %v841, %v507
    %v846 = vsub.f32 %v842, %v505
    %v847 = vsub.f32 %v843, %v508
    %v848 = vsub.f32 %v844, %v506
    %v849 = vld [vmem:[#allocation2] sm:$0xff]
    %v850 = vld [vmem:[#allocation2 + $0x8] sm:$0xff]
    %v851 = vld [vmem:[#allocation2 + $0x10] sm:$0xff]
    %v852 = vld [vmem:[#allocation2 + $0x18] sm:$0xff]
    %v853 = vmul.f32 %v96, %v845
    %v854 = vmul.f32 %v97, %v846
    %v855 = vmul.f32 %v96, %v847
    %v856 = vmul.f32 %v97, %v848
    %v857 = vadd.f32 %v807, %v853
    %v858 = vadd.f32 %v808, %v854
    %v859 = vadd.f32 %v809, %v855
    %v860 = vadd.f32 %v810, %v856
    %s861 = scalar_lea.vmem [#allocation9], 320
    %v862 = vld [vmem:[%s861] sm:$0xf]
    %v863 = vld [vmem:[%s861 + $0x4] sm:$0xf]
    %v864 = vld [vmem:[%s861 + $0x8] sm:$0xf]
    %v865 = vld [vmem:[%s861 + $0xc] sm:$0xf]
    %v866 = vld [vmem:[%s861 + $0x10] sm:$0xf]
    %v867 = vld [vmem:[%s861 + $0x14] sm:$0xf]
    %v868 = vld [vmem:[%s861 + $0x18] sm:$0xf]
    %v869 = vld [vmem:[%s861 + $0x1c] sm:$0xf]
    %v870 = vld [vmem:[%s861 + $0x20] sm:$0xf]
    %v871 = vld [vmem:[%s861 + $0x24] sm:$0xf]
    %v872 = vld [vmem:[%s861 + $0x28] sm:$0xf]
    %v873 = vld [vmem:[%s861 + $0x2c] sm:$0xf]
    %v874 = vld [vmem:[%s861 + $0x30] sm:$0xf]
    %v875 = vld [vmem:[%s861 + $0x34] sm:$0xf]
    %v876 = vld [vmem:[%s861 + $0x38] sm:$0xf]
    %v877 = vld [vmem:[%s861 + $0x3c] sm:$0xf]
    %v878 = vpack.c.bf16 %v859, %v857
    %v879 = vpack.c.bf16 %v860, %v858
    %v896 = vunpack.c.l.b16 %v862
    %v897 = vunpack.c.l.b16 %v863
    %v898 = vunpack.c.l.b16 %v864
    %v899 = vunpack.c.l.b16 %v865
    %v900 = vunpack.c.l.b16 %v866
    %v901 = vunpack.c.l.b16 %v867
    %v902 = vunpack.c.l.b16 %v868
    %v903 = vunpack.c.l.b16 %v869
    %v904 = vunpack.c.l.b16 %v870
    %v905 = vunpack.c.l.b16 %v871
    %v906 = vunpack.c.l.b16 %v872
    %v907 = vunpack.c.l.b16 %v873
    %v908 = vunpack.c.l.b16 %v874
    %v909 = vunpack.c.l.b16 %v875
    %v910 = vunpack.c.l.b16 %v876
    %v911 = vunpack.c.l.b16 %v877
    %v912 = vpack.c.b16 %v897, %v896
    %v913 = vpack.c.b16 %v899, %v898
    %v914 = vpack.c.b16 %v901, %v900
    %v915 = vpack.c.b16 %v903, %v902
    %v916 = vpack.c.b16 %v905, %v904
    %v917 = vpack.c.b16 %v907, %v906
    %v918 = vpack.c.b16 %v909, %v908
    %v919 = vpack.c.b16 %v911, %v910
    %928 = vmatpush.bf16.msra.mxu0 %v919
    %929 = vmatpush.bf16.msra.mxu0 %v918
    %930 = vmatpush.bf16.msra.mxu0 %v917
    %931 = vmatpush.bf16.msra.mxu0 %v916
    %932 = vmatpush.bf16.msra.mxu0 %v915
    %933 = vmatpush.bf16.msra.mxu0 %v914
    %934 = vmatpush.bf16.msra.mxu0 %v913
    %935 = vmatpush.bf16.msra.mxu0 %v912
    %936 = vmatmul.bf16.gmra.mxu0 %v878
    %v937 = vpop.f32.mrf.mxu0
    %v938 = vadd.f32 0.0, %v937
    %v939 = vpop.f32.mrf.mxu0
    %v940 = vadd.f32 0.0, %v939
    %941 = vmatmul.bf16.gmra.mxu0 %v879
    %v942 = vpop.f32.mrf.mxu0
    %v943 = vadd.f32 0.0, %v942
    %v944 = vpop.f32.mrf.mxu0
    %v945 = vadd.f32 0.0, %v944
    %946 = vdwg.mxu0
    %v947 = vadd.f32 %v849, %v938
    %v948 = vadd.f32 %v850, %v940
    %v949 = vadd.f32 %v851, %v943
    %v950 = vadd.f32 %v852, %v945
    %951 = vst [vmem:[#allocation2] sm:$0xff] %v947
    %952 = vst [vmem:[#allocation2 + $0x8] sm:$0xff] %v948
    %953 = vst [vmem:[#allocation2 + $0x10] sm:$0xff] %v949
    %954 = vst [vmem:[#allocation2 + $0x18] sm:$0xff] %v950
    %v955 = vld [vmem:[#allocation2] sm:$0xff]
    %v956 = vld [vmem:[#allocation2 + $0x8] sm:$0xff]
    %v957 = vld [vmem:[#allocation2 + $0x10] sm:$0xff]
    %v958 = vld [vmem:[#allocation2 + $0x18] sm:$0xff]
    %v960 = vperm.slane %v510, 0
    %v962 = vadd.f32 %v955, %v960
    %v963 = vadd.f32 %v956, %v960
    %v964 = vadd.f32 %v957, %v960
    %v965 = vadd.f32 %v958, %v960
    %vm966 = vcmp.ge.f32.partialorder %v962, 0.0
    %vm967 = vcmp.ge.f32.partialorder %v963, 0.0
    %v968 = vsel %vm966, %v962, 0.0
    %v969 = vsel %vm967, %v963, 0.0
    %v970 = vsel %vm966, %v964, 0.0
    %v971 = vsel %vm967, %v965, 0.0
    %972 = vst [vmem:[#allocation11] sm:$0xff] %v968
    %973 = vst [vmem:[#allocation11 + $0x8] sm:$0xff] %v969
    %974 = vst [vmem:[#allocation11 + $0x10] sm:$0xff] %v970
    %975 = vst [vmem:[#allocation11 + $0x18] sm:$0xff] %v971
    // Predicated region
    $region38: #{tpu_custom_call.1} parent=1 // pred_check
      _
    $region39: #{tpu_custom_call.1} parent=1 // pred_check_branch
      %977 = sbr.rel (0) target = $region41
    $region40: #{tpu_custom_call.1} parent=1 // pred_region
      %979 = vsyncadd [#allocation5], 0
      %s980 = sshll.u32 [#allocation11], 4
      %s981 = int_to_ptr.vmem [resolvable:$true] %s980
      %s982 = sshll.u32 %s5, 4
      %s983 = int_to_ptr.hbm [resolvable:$true] %s982
      %988 = dma.vmem_to_hbm [thread:$0]  %s981, 512, %s983, [#allocation5], 128, 128, 8
    $region41: #{tpu_custom_call.1} parent=1 // pred_fallthru
      _
    // Predicated region
    $region42: #{tpu_custom_call.1} parent=1 // pred_check
      _
    $region43: #{tpu_custom_call.1} parent=1 // pred_check_branch
      %990 = sbr.rel (0) target = $region45
    $region44: #{tpu_custom_call.1} parent=1 // pred_region
      %992 = dma.done [#allocation5], 512
    $region45: #{tpu_custom_call.1} parent=1 // pred_fallthru
      _
    %993 = vsyncpa [#allocation4], 1
    %994 = vsyncpa [#allocation7], 1
    %995 = vsyncpa [#allocation10], 1
    %996 = vsyncpa [#allocation5], 1

</llo_original>
